<compile_context>
chip_gen: v5e
topology: v5e:2x2
jax: 0.10.0
libtpu: 0.0.40
codegen_flags: <defaults>
</compile_context>

<pallas_src>
import functools

import jax
import jax.numpy as jnp
from jax.experimental import pallas as pl
from jax.experimental.pallas import tpu as pltpu


def _critic_kernel(x_ref,
                   w1_ref, b1_ref,
                   w2_ref, b2_ref,
                   w3_ref, b3_ref,
                   w4_ref, b4_ref,
                   o_ref):
    """Fused 4-layer MLP on one feature-major batch tile.

    x_ref: [n_states + n_actions, TILE_B]  (features on sublanes, batch on
    lanes).  Weights are PyTorch-layout [out, in]; biases are [out, 1] columns
    that broadcast over the lane (batch) axis.  Output: [n_actions, TILE_B].
    """
    h = jnp.dot(w1_ref[...], x_ref[...], preferred_element_type=jnp.float32)
    h = jnp.maximum(h + b1_ref[...], 0.0)

    h = jnp.dot(w2_ref[...], h, preferred_element_type=jnp.float32) + b2_ref[...]
    h = jnp.maximum(h, 0.0)

    h = jnp.dot(w3_ref[...], h, preferred_element_type=jnp.float32) + b3_ref[...]
    h = jnp.maximum(h, 0.0)

    q = jnp.dot(w4_ref[...], h, preferred_element_type=jnp.float32) + b4_ref[...]
    o_ref[...] = q.astype(o_ref.dtype)      # lane-dense store: [n_actions, TILE_B]


# Largest-first lane-tile candidates (all multiples of 128).  Working set per
# tile is tiny (weights ~10 KiB resident; x/out streams ~0.5 MiB each at 8192
# lanes, double-buffered), so VMEM never constrains this list on any chip.
_TILE_CANDIDATES = (8192, 4096, 2048, 1024, 512, 256, 128)


def _pick_batch_tile(padded_b):
    """Largest lane-dense tile dividing `padded_b`, keeping >=2 grid steps
    when there is enough work (v7x dual-TC sharding)."""
    if padded_b <= 128:
        return padded_b
    for t in _TILE_CANDIDATES:
        if padded_b % t == 0 and padded_b // t >= 2:
            return t
    return 128


@functools.partial(jax.jit, static_argnames=("tile_b",))
def critic_forward_fm(x_fm, params, tile_b=None):
    """Hot-path entry: feature-major in, feature-major out.

    x_fm: [n_states + n_actions, B]  (rows = concat(state, action) features)
    returns q_fm: [n_actions, B]
    """
    n_in, batch = x_fm.shape
    n_actions = params["w4"].shape[0]

    # Pad the lane (batch) axis up to a multiple of 128 so tiles stay bounded
    # and lane-dense even for ragged batches; slice the result at the end.
    padded_b = -(-batch // 128) * 128
    if tile_b is None:
        tile_b = _pick_batch_tile(padded_b)
    else:
        padded_b = -(-padded_b // tile_b) * tile_b
    if padded_b != batch:
        x_fm = jnp.pad(x_fm, ((0, 0), (0, padded_b - batch)))

    grid = (padded_b // tile_b,)

    def tiled(rows):                 # activation stream: tiled along batch/lanes
        return pl.BlockSpec((rows, tile_b), lambda i: (0, i))

    def resident(arr):               # weights/biases: same block every step -> VMEM resident
        return pl.BlockSpec(arr.shape, lambda i: (0, 0))

    q_fm = pl.pallas_call(
        _critic_kernel,
        out_shape=jax.ShapeDtypeStruct((n_actions, padded_b), jnp.float32),
        grid=grid,
        in_specs=[
            tiled(n_in),
            resident(params["w1"]), resident(params["b1"]),
            resident(params["w2"]), resident(params["b2"]),
            resident(params["w3"]), resident(params["b3"]),
            resident(params["w4"]), resident(params["b4"]),
        ],
        out_specs=tiled(n_actions),
        compiler_params=pltpu.CompilerParams(
            dimension_semantics=("parallel",)),   # v7x: batch tiles split across both TCs
    )(x_fm,
      params["w1"], params["b1"],
      params["w2"], params["b2"],
      params["w3"], params["b3"],
      params["w4"], params["b4"])

    if padded_b != batch:
        q_fm = q_fm[:, :batch]
    return q_fm


def critic_forward(state, action, params, tile_b=None):
    """PyTorch-interface compatibility wrapper.

    state: [B, n_states], action: [B, n_actions] -> q: [B, n_actions].
    Callers that can keep replay-buffer batches feature-major should use
    `critic_forward_fm` directly and skip these layout ops.
    """
    x_fm = jnp.concatenate((state, action), axis=1).T   # [n_in, B]
    return critic_forward_fm(x_fm, params, tile_b=tile_b).T


def init_critic_params(key, n_states, n_actions, hidden=20):
    """PyTorch nn.Linear default init (U[-1/sqrt(fan_in), 1/sqrt(fan_in)]).

    Weights kept in PyTorch [out, in] layout, biases as [out, 1] columns."""
    def linear(k, fan_in, fan_out):
        kw, kb = jax.random.split(k)
        bound = 1.0 / jnp.sqrt(float(fan_in))
        w = jax.random.uniform(kw, (fan_out, fan_in), minval=-bound, maxval=bound,
                               dtype=jnp.float32)
        b = jax.random.uniform(kb, (fan_out, 1), minval=-bound, maxval=bound,
                               dtype=jnp.float32)
        return w, b

    k1, k2, k3, k4 = jax.random.split(key, 4)
    w1, b1 = linear(k1, n_states + n_actions, hidden)
    w2, b2 = linear(k2, hidden, hidden)
    w3, b3 = linear(k3, hidden, hidden)
    w4, b4 = linear(k4, hidden, n_actions)
    return {"w1": w1, "b1": b1, "w2": w2, "b2": b2,
            "w3": w3, "b3": b3, "w4": w4, "b4": b4}


def critic_reference(state, action, params):
    """Plain-JAX reference matching the PyTorch forward exactly."""
    x = jnp.concatenate((state, action), axis=1)
    h = jnp.maximum(x @ params["w1"].T + params["b1"].T, 0.0)
    h = jnp.maximum(h @ params["w2"].T + params["b2"].T, 0.0)
    h = jnp.maximum(h @ params["w3"].T + params["b3"].T, 0.0)
    return h @ params["w4"].T + params["b4"].T


if __name__ == "__main__":
    N_STATES, N_ACTIONS = 6, 2

    key = jax.random.PRNGKey(0)
    k_state, k_action, k_params = jax.random.split(key, 3)
    params = init_critic_params(k_params, N_STATES, N_ACTIONS)

    # Small batch (not a multiple of 128): exercises the lane-padding path
    # through the PyTorch-interface compatibility wrapper.
    B = 8
    state = jax.random.normal(k_state, (B, N_STATES), dtype=jnp.float32)
    action = jax.random.normal(k_action, (B, N_ACTIONS), dtype=jnp.float32)
    q = jax.block_until_ready(critic_forward(state, action, params))
    q_ref = critic_reference(state, action, params)
    assert q.shape == (B, N_ACTIONS)
    assert jnp.allclose(q, q_ref, atol=1e-5, rtol=1e-5)

    # Ragged larger batch (300 -> padded to 384, three 128-lane tiles) via the
    # feature-major fast path.
    B2 = 300
    state2 = jax.random.normal(k_state, (B2, N_STATES), dtype=jnp.float32)
    action2 = jax.random.normal(k_action, (B2, N_ACTIONS), dtype=jnp.float32)
    x2_fm = jnp.concatenate((state2, action2), axis=1).T
    q2_fm = jax.block_until_ready(critic_forward_fm(x2_fm, params))
    q2_ref = critic_reference(state2, action2, params)
    assert q2_fm.shape == (N_ACTIONS, B2)
    assert jnp.allclose(q2_fm.T, q2_ref, atol=1e-5, rtol=1e-5)

    # 128-divisible batch: auto tile keeps >= 2 grid steps (512 -> 2 x 256).
    B3 = 512
    state3 = jax.random.normal(k_state, (B3, N_STATES), dtype=jnp.float32)
    action3 = jax.random.normal(k_action, (B3, N_ACTIONS), dtype=jnp.float32)
    x3_fm = jnp.concatenate((state3, action3), axis=1).T
    q3_fm = jax.block_until_ready(critic_forward_fm(x3_fm, params))
    q3_ref = critic_reference(state3, action3, params)
    assert q3_fm.shape == (N_ACTIONS, B3)
    assert jnp.allclose(q3_fm.T, q3_ref, atol=1e-5, rtol=1e-5)

    print("KERNEL_OK")
</pallas_src>

<mosaic_0001>
module attributes {stable_mosaic.version = 11 : i64} {
  func.func @_critic_kernel(%arg0: i32, %arg1: memref<8x128xf32, #tpu.memory_space<vmem>>, %arg2: memref<20x8xf32, #tpu.memory_space<vmem>>, %arg3: memref<20x1xf32, #tpu.memory_space<vmem>>, %arg4: memref<20x20xf32, #tpu.memory_space<vmem>>, %arg5: memref<20x1xf32, #tpu.memory_space<vmem>>, %arg6: memref<20x20xf32, #tpu.memory_space<vmem>>, %arg7: memref<20x1xf32, #tpu.memory_space<vmem>>, %arg8: memref<2x20xf32, #tpu.memory_space<vmem>>, %arg9: memref<2x1xf32, #tpu.memory_space<vmem>>, %arg10: memref<2x128xf32, #tpu.memory_space<vmem>>) attributes {dimension_semantics = [#tpu.dimension_semantics<parallel>], iteration_bounds = array<i64: 1>, scalar_prefetch = 0 : i64, scratch_operands = 0 : i64, tpu.core_type = #tpu.core_type<tc>, window_params = [{transform_indices = @transform_0, window_bounds = array<i64: 8, 128>}, {pipeline_mode = #tpu.pipeline_mode<synchronous>, transform_indices = @transform_1, window_bounds = array<i64: 20, 8>}, {pipeline_mode = #tpu.pipeline_mode<synchronous>, transform_indices = @transform_2, window_bounds = array<i64: 20, 1>}, {pipeline_mode = #tpu.pipeline_mode<synchronous>, transform_indices = @transform_3, window_bounds = array<i64: 20, 20>}, {pipeline_mode = #tpu.pipeline_mode<synchronous>, transform_indices = @transform_4, window_bounds = array<i64: 20, 1>}, {pipeline_mode = #tpu.pipeline_mode<synchronous>, transform_indices = @transform_5, window_bounds = array<i64: 20, 20>}, {pipeline_mode = #tpu.pipeline_mode<synchronous>, transform_indices = @transform_6, window_bounds = array<i64: 20, 1>}, {pipeline_mode = #tpu.pipeline_mode<synchronous>, transform_indices = @transform_7, window_bounds = array<i64: 2, 20>}, {pipeline_mode = #tpu.pipeline_mode<synchronous>, transform_indices = @transform_8, window_bounds = array<i64: 2, 1>}, {transform_indices = @transform_9, window_bounds = array<i64: 2, 128>}]} {
    %c0 = arith.constant 0 : index
    %c0_0 = arith.constant 0 : index
    %0 = vector.load %arg2[%c0, %c0_0] : memref<20x8xf32, #tpu.memory_space<vmem>>, vector<20x8xf32>
    %c0_1 = arith.constant 0 : index
    %c0_2 = arith.constant 0 : index
    %1 = vector.load %arg1[%c0_1, %c0_2] : memref<8x128xf32, #tpu.memory_space<vmem>>, vector<8x128xf32>
    %cst = arith.constant dense<0.000000e+00> : vector<20x128xf32>
    %2 = tpu.matmul %0, %1, %cst {dimension_numbers = #tpu.dot_dimension_numbers<[1], [0], [0], [1], [0, 0, 1, 1], [], []>} : vector<20x8xf32>, vector<8x128xf32>, vector<20x128xf32> -> vector<20x128xf32>
    %c0_3 = arith.constant 0 : index
    %c0_4 = arith.constant 0 : index
    %3 = vector.load %arg3[%c0_3, %c0_4] : memref<20x1xf32, #tpu.memory_space<vmem>>, vector<20x1xf32>
    %4 = vector.broadcast %3 : vector<20x1xf32> to vector<20x128xf32>
    %5 = arith.addf %2, %4 : vector<20x128xf32>
    %cst_5 = arith.constant 0.000000e+00 : f32
    %6 = vector.broadcast %cst_5 : f32 to vector<20x128xf32>
    %7 = arith.maximumf %5, %6 : vector<20x128xf32>
    %c0_6 = arith.constant 0 : index
    %c0_7 = arith.constant 0 : index
    %8 = vector.load %arg4[%c0_6, %c0_7] : memref<20x20xf32, #tpu.memory_space<vmem>>, vector<20x20xf32>
    %cst_8 = arith.constant dense<0.000000e+00> : vector<20x128xf32>
    %9 = tpu.matmul %8, %7, %cst_8 {dimension_numbers = #tpu.dot_dimension_numbers<[1], [0], [0], [1], [0, 0, 1, 1], [], []>} : vector<20x20xf32>, vector<20x128xf32>, vector<20x128xf32> -> vector<20x128xf32>
    %c0_9 = arith.constant 0 : index
    %c0_10 = arith.constant 0 : index
    %10 = vector.load %arg5[%c0_9, %c0_10] : memref<20x1xf32, #tpu.memory_space<vmem>>, vector<20x1xf32>
    %11 = vector.broadcast %10 : vector<20x1xf32> to vector<20x128xf32>
    %12 = arith.addf %9, %11 : vector<20x128xf32>
    %cst_11 = arith.constant 0.000000e+00 : f32
    %13 = vector.broadcast %cst_11 : f32 to vector<20x128xf32>
    %14 = arith.maximumf %12, %13 : vector<20x128xf32>
    %c0_12 = arith.constant 0 : index
    %c0_13 = arith.constant 0 : index
    %15 = vector.load %arg6[%c0_12, %c0_13] : memref<20x20xf32, #tpu.memory_space<vmem>>, vector<20x20xf32>
    %cst_14 = arith.constant dense<0.000000e+00> : vector<20x128xf32>
    %16 = tpu.matmul %15, %14, %cst_14 {dimension_numbers = #tpu.dot_dimension_numbers<[1], [0], [0], [1], [0, 0, 1, 1], [], []>} : vector<20x20xf32>, vector<20x128xf32>, vector<20x128xf32> -> vector<20x128xf32>
    %c0_15 = arith.constant 0 : index
    %c0_16 = arith.constant 0 : index
    %17 = vector.load %arg7[%c0_15, %c0_16] : memref<20x1xf32, #tpu.memory_space<vmem>>, vector<20x1xf32>
    %18 = vector.broadcast %17 : vector<20x1xf32> to vector<20x128xf32>
    %19 = arith.addf %16, %18 : vector<20x128xf32>
    %cst_17 = arith.constant 0.000000e+00 : f32
    %20 = vector.broadcast %cst_17 : f32 to vector<20x128xf32>
    %21 = arith.maximumf %19, %20 : vector<20x128xf32>
    %c0_18 = arith.constant 0 : index
    %c0_19 = arith.constant 0 : index
    %22 = vector.load %arg8[%c0_18, %c0_19] : memref<2x20xf32, #tpu.memory_space<vmem>>, vector<2x20xf32>
    %cst_20 = arith.constant dense<0.000000e+00> : vector<2x128xf32>
    %23 = tpu.matmul %22, %21, %cst_20 {dimension_numbers = #tpu.dot_dimension_numbers<[1], [0], [0], [1], [0, 0, 1, 1], [], []>} : vector<2x20xf32>, vector<20x128xf32>, vector<2x128xf32> -> vector<2x128xf32>
    %c0_21 = arith.constant 0 : index
    %c0_22 = arith.constant 0 : index
    %24 = vector.load %arg9[%c0_21, %c0_22] : memref<2x1xf32, #tpu.memory_space<vmem>>, vector<2x1xf32>
    %25 = vector.broadcast %24 : vector<2x1xf32> to vector<2x128xf32>
    %26 = arith.addf %23, %25 : vector<2x128xf32>
    %c0_23 = arith.constant 0 : index
    %c0_24 = arith.constant 0 : index
    %27 = vector.load %arg10[%c0_23, %c0_24] : memref<2x128xf32, #tpu.memory_space<vmem>>, vector<2x128xf32>
    tpu.vector_store %arg10[%c0_23, %c0_24], %26 {strides = array<i32>} : memref<2x128xf32, #tpu.memory_space<vmem>>, vector<2x128xf32>,
    return
  }
  func.func @transform_0(%arg0: i32) -> (i32, i32) {
    %c0_i32 = arith.constant 0 : i32
    %c0_i32_0 = arith.constant 0 : i32
    return %c0_i32, %arg0 : i32, i32
  }
  func.func @transform_1(%arg0: i32) -> (i32, i32) {
    %c0_i32 = arith.constant 0 : i32
    %c0_i32_0 = arith.constant 0 : i32
    %c0_i32_1 = arith.constant 0 : i32
    return %c0_i32, %c0_i32_0 : i32, i32
  }
  func.func @transform_2(%arg0: i32) -> (i32, i32) {
    %c0_i32 = arith.constant 0 : i32
    %c0_i32_0 = arith.constant 0 : i32
    %c0_i32_1 = arith.constant 0 : i32
    return %c0_i32, %c0_i32_0 : i32, i32
  }
  func.func @transform_3(%arg0: i32) -> (i32, i32) {
    %c0_i32 = arith.constant 0 : i32
    %c0_i32_0 = arith.constant 0 : i32
    %c0_i32_1 = arith.constant 0 : i32
    return %c0_i32, %c0_i32_0 : i32, i32
  }
  func.func @transform_4(%arg0: i32) -> (i32, i32) {
    %c0_i32 = arith.constant 0 : i32
    %c0_i32_0 = arith.constant 0 : i32
    %c0_i32_1 = arith.constant 0 : i32
    return %c0_i32, %c0_i32_0 : i32, i32
  }
  func.func @transform_5(%arg0: i32) -> (i32, i32) {
    %c0_i32 = arith.constant 0 : i32
    %c0_i32_0 = arith.constant 0 : i32
    %c0_i32_1 = arith.constant 0 : i32
    return %c0_i32, %c0_i32_0 : i32, i32
  }
  func.func @transform_6(%arg0: i32) -> (i32, i32) {
    %c0_i32 = arith.constant 0 : i32
    %c0_i32_0 = arith.constant 0 : i32
    %c0_i32_1 = arith.constant 0 : i32
    return %c0_i32, %c0_i32_0 : i32, i32
  }
  func.func @transform_7(%arg0: i32) -> (i32, i32) {
    %c0_i32 = arith.constant 0 : i32
    %c0_i32_0 = arith.constant 0 : i32
    %c0_i32_1 = arith.constant 0 : i32
    return %c0_i32, %c0_i32_0 : i32, i32
  }
  func.func @transform_8(%arg0: i32) -> (i32, i32) {
    %c0_i32 = arith.constant 0 : i32
    %c0_i32_0 = arith.constant 0 : i32
    %c0_i32_1 = arith.constant 0 : i32
    return %c0_i32, %c0_i32_0 : i32, i32
  }
  func.func @transform_9(%arg0: i32) -> (i32, i32) {
    %c0_i32 = arith.constant 0 : i32
    %c0_i32_0 = arith.constant 0 : i32
    return %c0_i32, %arg0 : i32, i32
  }
}

</mosaic_0001>

<llo_original>
// kernel: critic_forward_fm.1
$region0: #{critic_forward_fm.1}
  #allocation0 [shape = 'u32[]', space=smem, size = 0x4, offset = 0x4, fixed_abs, tag = 'smem constant byte address 0x4 - core index']
  #allocation1 [shape = 'u32[72,128]{1,0:T(1,128)}', space=vmem, size = 0x9000, scoped, tag = 'internal scratch']
  %s0 = inlined_call_operand.vmem [shape: f32[8,128], index: 0, kind: input, shape index: {}]
  %s1 = inlined_call_operand.vmem [shape: f32[20,8], index: 1, kind: input, shape index: {}]
  %s2 = inlined_call_operand.vmem [shape: f32[20,1], index: 2, kind: input, shape index: {}]
  %s3 = inlined_call_operand.vmem [shape: f32[20,20], index: 3, kind: input, shape index: {}]
  %s4 = inlined_call_operand.vmem [shape: f32[20,1], index: 4, kind: input, shape index: {}]
  %s5 = inlined_call_operand.vmem [shape: f32[20,20], index: 5, kind: input, shape index: {}]
  %s6 = inlined_call_operand.vmem [shape: f32[20,1], index: 6, kind: input, shape index: {}]
  %s7 = inlined_call_operand.vmem [shape: f32[2,20], index: 7, kind: input, shape index: {}]
  %s8 = inlined_call_operand.vmem [shape: f32[2,1], index: 8, kind: input, shape index: {}]
  %s9 = inlined_call_operand.hbm [shape: f32[2,128], index: 9, kind: output, shape index: {}]
  %s10 = sld [smem:[#allocation0]]
  $region46: #{critic_forward_fm.1} parent=0
    _
  %s12 = ssub.s32 1, %s10
  %s13 = scalar_select 0, %s12, %s10
  $region1: #{critic_forward_fm.1} parent=0
    #allocation2 [shape = 'u8[1024]{0}', space=vmem, size = 0x400, scoped, tag = 'output window, operand 0, single buffered']
    #allocation3 [shape = 's32[1]{0}', space=sflag, size = 0x4, scoped, tag = 'scoped memory for critic_forward_fm.1']
    %14 = vsyncpa [#allocation3], 0
    // Predicated region
    $region2: #{critic_forward_fm.1} parent=1 // pred_check
      _
    $region3: #{critic_forward_fm.1} parent=1 // pred_check_branch
      %16 = sbr.rel (0) target = $region5
    $region4: #{critic_forward_fm.1} parent=1 // pred_region
      _
    $region5: #{critic_forward_fm.1} parent=1 // pred_fallthru
      _
    // Predicated region
    $region6: #{critic_forward_fm.1} parent=1 // pred_check
      _
    $region7: #{critic_forward_fm.1} parent=1 // pred_check_branch
      %18 = sbr.rel (0) target = $region9
    $region8: #{critic_forward_fm.1} parent=1 // pred_region
      _
    $region9: #{critic_forward_fm.1} parent=1 // pred_fallthru
      _
    // Predicated region
    $region10: #{critic_forward_fm.1} parent=1 // pred_check
      _
    $region11: #{critic_forward_fm.1} parent=1 // pred_check_branch
      %20 = sbr.rel (0) target = $region13
    $region12: #{critic_forward_fm.1} parent=1 // pred_region
      _
    $region13: #{critic_forward_fm.1} parent=1 // pred_fallthru
      _
    // Predicated region
    $region14: #{critic_forward_fm.1} parent=1 // pred_check
      _
    $region15: #{critic_forward_fm.1} parent=1 // pred_check_branch
      %22 = sbr.rel (0) target = $region17
    $region16: #{critic_forward_fm.1} parent=1 // pred_region
      _
    $region17: #{critic_forward_fm.1} parent=1 // pred_fallthru
      _
    // Predicated region
    $region18: #{critic_forward_fm.1} parent=1 // pred_check
      _
    $region19: #{critic_forward_fm.1} parent=1 // pred_check_branch
      %24 = sbr.rel (0) target = $region21
    $region20: #{critic_forward_fm.1} parent=1 // pred_region
      _
    $region21: #{critic_forward_fm.1} parent=1 // pred_fallthru
      _
    // Predicated region
    $region22: #{critic_forward_fm.1} parent=1 // pred_check
      _
    $region23: #{critic_forward_fm.1} parent=1 // pred_check_branch
      %26 = sbr.rel (0) target = $region25
    $region24: #{critic_forward_fm.1} parent=1 // pred_region
      _
    $region25: #{critic_forward_fm.1} parent=1 // pred_fallthru
      _
    // Predicated region
    $region26: #{critic_forward_fm.1} parent=1 // pred_check
      _
    $region27: #{critic_forward_fm.1} parent=1 // pred_check_branch
      %28 = sbr.rel (0) target = $region29
    $region28: #{critic_forward_fm.1} parent=1 // pred_region
      _
    $region29: #{critic_forward_fm.1} parent=1 // pred_fallthru
      _
    // Predicated region
    $region30: #{critic_forward_fm.1} parent=1 // pred_check
      _
    $region31: #{critic_forward_fm.1} parent=1 // pred_check_branch
      %30 = sbr.rel (0) target = $region33
    $region32: #{critic_forward_fm.1} parent=1 // pred_region
      _
    $region33: #{critic_forward_fm.1} parent=1 // pred_fallthru
      _
    // Predicated region
    $region34: #{critic_forward_fm.1} parent=1 // pred_check
      _
    $region35: #{critic_forward_fm.1} parent=1 // pred_check_branch
      %32 = sbr.rel (0) target = $region37
    $region36: #{critic_forward_fm.1} parent=1 // pred_region
      _
    $region37: #{critic_forward_fm.1} parent=1 // pred_fallthru
      _
    %v33 = vld [vmem:[%s1] sm:$0xff]
    %v34 = vld [vmem:[%s1 + $0x8] sm:$0xff]
    %v35 = vld [vmem:[%s1 + $0x10] sm:$0xf]
    %v36 = vld [vmem:[%s0] sm:$0xff]
    %v37 = vld [vmem:[%s2] sm:$0xff]
    %v38 = vld [vmem:[%s2 + $0x8] sm:$0xff]
    %v39 = vld [vmem:[%s2 + $0x10] sm:$0xf]
    %41 = vset.pattern.permute.xlu0 0
    %42 = vperm.xlu0 %41, %v37
    %v43 = vpop.permute.xlu0 %42
    %46 = vset.pattern.permute.xlu0 0
    %47 = vperm.xlu0 %46, %v38
    %v48 = vpop.permute.xlu0 %47
    %51 = vset.pattern.permute.xlu0 0
    %52 = vperm.xlu0 %51, %v39
    %v53 = vpop.permute.xlu0 %52
    %vm55 = vcmask 64512
    %v57 = vsel %vm55, %v33, 0
    %v60 = vsel %vm55, %v34, 0
    %v63 = vsel %vm55, %v35, 0
    %65 = vmatpush.msra.mxu0 0.0
    %66 = vmatpush.msra.mxu0 0.0
    %67 = vmatpush.msra.mxu0 0.0
    %68 = vmatpush.msra.mxu0 0.0
    %69 = vmatpush.msra.mxu0 0.0
    %70 = vmatpush.msra.mxu0 0.0
    %71 = vmatpush.msra.mxu0 0.0
    %72 = vmatpush.msra.mxu0 0.0
    %73 = vmatpush.msra.mxu0 0.0
    %74 = vmatpush.msra.mxu0 0.0
    %75 = vmatpush.msra.mxu0 0.0
    %76 = vmatpush.msra.mxu0 0.0
    %77 = vmatpush.msra.mxu0 0.0
    %78 = vmatpush.msra.mxu0 0.0
    %79 = vmatpush.msra.mxu0 0.0
    %80 = vmatpush.msra.mxu0 %v36
    %81 = vmatmul.f32.gmra.mxu0 %v57
    %v82 = vpop.f32.mrf.mxu0
    %v83 = vadd.f32 %v43, %v82
    %84 = vmatmul.f32.gmra.mxu0 %v60
    %v85 = vpop.f32.mrf.mxu0
    %v86 = vadd.f32 %v48, %v85
    %87 = vmatmul.f32.gmra.mxu0 %v63
    %v88 = vpop.f32.mrf.mxu0
    %v89 = vadd.f32 %v53, %v88
    %90 = vdwg.mxu0
    %v91 = vmax.f32 %v83, 0.0
    %v92 = vmax.f32 %v86, 0.0
    %v93 = vmax.f32 %v89, 0.0
    %v94 = vld [vmem:[%s3] sm:$0xff]
    %v95 = vld [vmem:[%s3 + $0x8] sm:$0xff]
    %v96 = vld [vmem:[%s3 + $0x10] sm:$0xf]
    %v97 = vld [vmem:[%s4] sm:$0xff]
    %v98 = vld [vmem:[%s4 + $0x8] sm:$0xff]
    %v99 = vld [vmem:[%s4 + $0x10] sm:$0xf]
    %101 = vset.pattern.permute.xlu0 0
    %102 = vperm.xlu0 %101, %v97
    %v103 = vpop.permute.xlu0 %102
    %106 = vset.pattern.permute.xlu0 0
    %107 = vperm.xlu0 %106, %v98
    %v108 = vpop.permute.xlu0 %107
    %111 = vset.pattern.permute.xlu0 0
    %112 = vperm.xlu0 %111, %v99
    %v113 = vpop.permute.xlu0 %112
    %vm115 = vcmask 162816
    %v117 = vsel %vm115, %v94, 0
    %v120 = vsel %vm115, %v95, 0
    %v123 = vsel %vm115, %v96, 0
    %vm125 = vcmask 1043456
    %v127 = vsel %vm125, %v93, 0
    %129 = vmatpush.msra.mxu0 0.0
    %130 = vmatpush.msra.mxu0 0.0
    %131 = vmatpush.msra.mxu0 0.0
    %132 = vmatpush.msra.mxu0 0.0
    %133 = vmatpush.msra.mxu0 0.0
    %134 = vmatpush.msra.mxu0 0.0
    %135 = vmatpush.msra.mxu0 0.0
    %136 = vmatpush.msra.mxu0 0.0
    %137 = vmatpush.msra.mxu0 0.0
    %138 = vmatpush.msra.mxu0 0.0
    %139 = vmatpush.msra.mxu0 0.0
    %140 = vmatpush.msra.mxu0 0.0
    %141 = vmatpush.msra.mxu0 0.0
    %142 = vmatpush.msra.mxu0 %v127
    %143 = vmatpush.msra.mxu0 %v92
    %144 = vmatpush.msra.mxu0 %v91
    %145 = vmatmul.f32.gmra.mxu0 %v117
    %v146 = vpop.f32.mrf.mxu0
    %v147 = vadd.f32 %v103, %v146
    %148 = vmatmul.f32.gmra.mxu0 %v120
    %v149 = vpop.f32.mrf.mxu0
    %v150 = vadd.f32 %v108, %v149
    %151 = vmatmul.f32.gmra.mxu0 %v123
    %v152 = vpop.f32.mrf.mxu0
    %v153 = vadd.f32 %v113, %v152
    %154 = vdwg.mxu0
    %v155 = vmax.f32 %v147, 0.0
    %v156 = vmax.f32 %v150, 0.0
    %v157 = vmax.f32 %v153, 0.0
    %v158 = vld [vmem:[%s5] sm:$0xff]
    %v159 = vld [vmem:[%s5 + $0x8] sm:$0xff]
    %v160 = vld [vmem:[%s5 + $0x10] sm:$0xf]
    %v161 = vld [vmem:[%s6] sm:$0xff]
    %v162 = vld [vmem:[%s6 + $0x8] sm:$0xff]
    %v163 = vld [vmem:[%s6 + $0x10] sm:$0xf]
    %165 = vset.pattern.permute.xlu0 0
    %166 = vperm.xlu0 %165, %v161
    %v167 = vpop.permute.xlu0 %166
    %170 = vset.pattern.permute.xlu0 0
    %171 = vperm.xlu0 %170, %v162
    %v172 = vpop.permute.xlu0 %171
    %175 = vset.pattern.permute.xlu0 0
    %176 = vperm.xlu0 %175, %v163
    %v177 = vpop.permute.xlu0 %176
    %v180 = vsel %vm115, %v158, 0
    %v183 = vsel %vm115, %v159, 0
    %v186 = vsel %vm115, %v160, 0
    %v189 = vsel %vm125, %v157, 0
    %191 = vmatpush.msra.mxu0 0.0
    %192 = vmatpush.msra.mxu0 0.0
    %193 = vmatpush.msra.mxu0 0.0
    %194 = vmatpush.msra.mxu0 0.0
    %195 = vmatpush.msra.mxu0 0.0
    %196 = vmatpush.msra.mxu0 0.0
    %197 = vmatpush.msra.mxu0 0.0
    %198 = vmatpush.msra.mxu0 0.0
    %199 = vmatpush.msra.mxu0 0.0
    %200 = vmatpush.msra.mxu0 0.0
    %201 = vmatpush.msra.mxu0 0.0
    %202 = vmatpush.msra.mxu0 0.0
    %203 = vmatpush.msra.mxu0 0.0
    %204 = vmatpush.msra.mxu0 %v189
    %205 = vmatpush.msra.mxu0 %v156
    %206 = vmatpush.msra.mxu0 %v155
    %207 = vmatmul.f32.gmra.mxu0 %v180
    %v208 = vpop.f32.mrf.mxu0
    %v209 = vadd.f32 %v167, %v208
    %210 = vmatmul.f32.gmra.mxu0 %v183
    %v211 = vpop.f32.mrf.mxu0
    %v212 = vadd.f32 %v172, %v211
    %213 = vmatmul.f32.gmra.mxu0 %v186
    %v214 = vpop.f32.mrf.mxu0
    %v215 = vadd.f32 %v177, %v214
    %216 = vdwg.mxu0
    %v217 = vmax.f32 %v209, 0.0
    %v218 = vmax.f32 %v212, 0.0
    %v219 = vmax.f32 %v215, 0.0
    %v220 = vld [vmem:[%s7] sm:$0x3]
    %v221 = vld [vmem:[%s8] sm:$0x3]
    %223 = vset.pattern.permute.xlu0 0
    %224 = vperm.xlu0 %223, %v221
    %v225 = vpop.permute.xlu0 %224
    %v228 = vsel %vm115, %v220, 0
    %v231 = vsel %vm125, %v219, 0
    %233 = vmatpush.msra.mxu0 0.0
    %234 = vmatpush.msra.mxu0 0.0
    %235 = vmatpush.msra.mxu0 0.0
    %236 = vmatpush.msra.mxu0 0.0
    %237 = vmatpush.msra.mxu0 0.0
    %238 = vmatpush.msra.mxu0 0.0
    %239 = vmatpush.msra.mxu0 0.0
    %240 = vmatpush.msra.mxu0 0.0
    %241 = vmatpush.msra.mxu0 0.0
    %242 = vmatpush.msra.mxu0 0.0
    %243 = vmatpush.msra.mxu0 0.0
    %244 = vmatpush.msra.mxu0 0.0
    %245 = vmatpush.msra.mxu0 0.0
    %246 = vmatpush.msra.mxu0 %v231
    %247 = vmatpush.msra.mxu0 %v218
    %248 = vmatpush.msra.mxu0 %v217
    %249 = vmatmul.f32.gmra.mxu0 %v228
    %v250 = vpop.f32.mrf.mxu0
    %v251 = vadd.f32 %v225, %v250
    %252 = vdwg.mxu0
    %253 = vst [vmem:[#allocation2] sm:$0x3] %v251
    // Predicated region
    $region38: #{critic_forward_fm.1} parent=1 // pred_check
      _
    $region39: #{critic_forward_fm.1} parent=1 // pred_check_branch
      %255 = sbr.rel (0) target = $region41
    $region40: #{critic_forward_fm.1} parent=1 // pred_region
      %257 = vsyncadd [#allocation3], 0
      %s259 = sshll.u32 [#allocation2], 4
      %s260 = int_to_ptr.vmem [resolvable:$true] %s259
      %s261 = sshll.u32 %s9, 4
      %s262 = int_to_ptr.hbm [resolvable:$true] %s261
      %264 = dma.vmem_to_hbm [thread:$0]  %s260, 32, %s262, [#allocation3]
    $region41: #{critic_forward_fm.1} parent=1 // pred_fallthru
      _
    // Predicated region
    $region42: #{critic_forward_fm.1} parent=1 // pred_check
      _
    $region43: #{critic_forward_fm.1} parent=1 // pred_check_branch
      %266 = sbr.rel (0) target = $region45
    $region44: #{critic_forward_fm.1} parent=1 // pred_region
      %268 = dma.done [#allocation3], 32
    $region45: #{critic_forward_fm.1} parent=1 // pred_fallthru
      _
    %269 = vsyncpa [#allocation3], 1

</llo_original>
